<compile_context>
chip_gen: v7x
topology: tpu7x:2x2x1
jax: 0.10.0
libtpu: 0.0.40
codegen_flags: <defaults>
</compile_context>

<pallas_src>
import jax
import jax.numpy as jnp
from jax.experimental import pallas as pl
from jax.experimental.pallas import tpu as pltpu


def _bpr_kernel(u_ref, i_ref, j_ref, pos_ref, neg_ref):
    # u_ref / i_ref / j_ref: (TB, D) embedding tiles for the current batch tile.
    # pos_ref / neg_ref:     (1, TB) lane-dense logit rows.
    u = u_ref[...].astype(jnp.float32)
    i = i_ref[...].astype(jnp.float32)
    j = j_ref[...].astype(jnp.float32)
    tb = u.shape[0]

    # Elementwise mul (VPU) + lane reduction (XLU) = the BPR dot products.
    pos = jnp.sum(u * i, axis=-1, keepdims=True)   # (TB, 1)
    neg = jnp.sum(u * j, axis=-1, keepdims=True)   # (TB, 1)

    # Relayout (TB, 1) -> (1, TB) so the store is lane-dense (unmasked vst).
    pos_ref[...] = pos.reshape(1, tb).astype(pos_ref.dtype)
    neg_ref[...] = neg.reshape(1, tb).astype(neg_ref.dtype)


def item_bpr_forward(user_table, item_table, u_idx, i_idx, j_idx, *, tb=128):
    """Pallas implementation of ItemBPRModel.forward -> (pos_logits, neg_logits)."""
    B = u_idx.shape[0]
    D = user_table.shape[1]

    # Embedding gathers done by XLA (dense, streaming-friendly kernel inputs).
    u_e = jnp.take(user_table, u_idx, axis=0)   # [B, D]
    i_e = jnp.take(item_table, i_idx, axis=0)   # [B, D]
    j_e = jnp.take(item_table, j_idx, axis=0)   # [B, D]

    # Pad batch up to a multiple of the tile so all blocks satisfy the
    # (8, 128) divisibility rules and the output tiles are lane-dense.
    bp = pl.cdiv(B, tb) * tb
    if bp != B:
        pad = bp - B
        u_e = jnp.pad(u_e, ((0, pad), (0, 0)))
        i_e = jnp.pad(i_e, ((0, pad), (0, 0)))
        j_e = jnp.pad(j_e, ((0, pad), (0, 0)))

    grid_spec = pltpu.PrefetchScalarGridSpec(
        num_scalar_prefetch=0,
        grid=(bp // tb,),
        in_specs=[
            pl.BlockSpec((tb, D), lambda t: (t, 0)),   # user tile
            pl.BlockSpec((tb, D), lambda t: (t, 0)),   # pos-item tile
            pl.BlockSpec((tb, D), lambda t: (t, 0)),   # neg-item tile
        ],
        out_specs=[
            pl.BlockSpec((1, tb), lambda t: (0, t)),   # pos logits (lane-dense)
            pl.BlockSpec((1, tb), lambda t: (0, t)),   # neg logits (lane-dense)
        ],
    )

    pos_row, neg_row = pl.pallas_call(
        _bpr_kernel,
        out_shape=(
            jax.ShapeDtypeStruct((1, bp), jnp.float32),
            jax.ShapeDtypeStruct((1, bp), jnp.float32),
        ),
        grid_spec=grid_spec,
        compiler_params=pltpu.CompilerParams(
            dimension_semantics=("parallel",)),
    )(u_e, i_e, j_e)

    # Unpack lane-dense rows back to the PyTorch [B, 1] layout.
    pos = pos_row.reshape(bp, 1)[:B]
    neg = neg_row.reshape(bp, 1)[:B]
    return pos, neg


def _xavier_normal(key, n_rows, n_cols, dtype=jnp.float32):
    # matches torch.nn.init.xavier_normal_ for a [n_rows, n_cols] weight
    std = (2.0 / (n_rows + n_cols)) ** 0.5
    return std * jax.random.normal(key, (n_rows, n_cols), dtype=dtype)


if __name__ == "__main__":
    # Small, deterministic configuration consistent with the module.
    n_user, n_item, embed_dim, batch = 64, 128, 32, 200  # batch not a tile multiple on purpose

    key = jax.random.PRNGKey(0)
    k_user, k_item, k_u, k_i, k_j = jax.random.split(key, 5)

    # Deterministic parameter init (xavier normal, as in _build()).
    user_table = _xavier_normal(k_user, n_user, embed_dim)
    item_table = _xavier_normal(k_item, n_item, embed_dim)

    # Deterministic example indices (the PyTorch inputs u, i, j of shape [B,1]
    # squeezed to [B]); the trailing "_" input of forward() is unused.
    u_idx = jax.random.randint(k_u, (batch,), 0, n_user, dtype=jnp.int32)
    i_idx = jax.random.randint(k_i, (batch,), 0, n_item, dtype=jnp.int32)
    j_idx = jax.random.randint(k_j, (batch,), 0, n_item, dtype=jnp.int32)

    pos, neg = item_bpr_forward(user_table, item_table, u_idx, i_idx, j_idx)
    jax.block_until_ready((pos, neg))

    # Pure-JAX reference check of the forward semantics.
    u_e = user_table[u_idx]
    i_e = item_table[i_idx]
    j_e = item_table[j_idx]
    pos_ref = jnp.sum(u_e * i_e, axis=-1, keepdims=True)
    neg_ref = jnp.sum(u_e * j_e, axis=-1, keepdims=True)
    assert pos.shape == (batch, 1) and neg.shape == (batch, 1)
    assert jnp.allclose(pos, pos_ref, atol=1e-5, rtol=1e-5)
    assert jnp.allclose(neg, neg_ref, atol=1e-5, rtol=1e-5)

    print("KERNEL_OK")
</pallas_src>

<mosaic_0001>
module attributes {stable_mosaic.version = 11 : i64} {
  func.func @_bpr_kernel(%arg0: i32, %arg1: memref<128x32xf32, #tpu.memory_space<vmem>>, %arg2: memref<128x32xf32, #tpu.memory_space<vmem>>, %arg3: memref<128x32xf32, #tpu.memory_space<vmem>>, %arg4: memref<1x128xf32, #tpu.memory_space<vmem>>, %arg5: memref<1x128xf32, #tpu.memory_space<vmem>>) attributes {dimension_semantics = [#tpu.dimension_semantics<parallel>], iteration_bounds = array<i64: 2>, scalar_prefetch = 0 : i64, scratch_operands = 0 : i64, tpu.core_type = #tpu.core_type<tc>, window_params = [{transform_indices = @transform_0, window_bounds = array<i64: 128, 32>}, {transform_indices = @transform_1, window_bounds = array<i64: 128, 32>}, {transform_indices = @transform_2, window_bounds = array<i64: 128, 32>}, {transform_indices = @transform_3, window_bounds = array<i64: 1, 128>}, {transform_indices = @transform_4, window_bounds = array<i64: 1, 128>}]} {
    %c0 = arith.constant 0 : index
    %c0_0 = arith.constant 0 : index
    %0 = vector.load %arg1[%c0, %c0_0] : memref<128x32xf32, #tpu.memory_space<vmem>>, vector<128x32xf32>
    %c0_1 = arith.constant 0 : index
    %c0_2 = arith.constant 0 : index
    %1 = vector.load %arg2[%c0_1, %c0_2] : memref<128x32xf32, #tpu.memory_space<vmem>>, vector<128x32xf32>
    %c0_3 = arith.constant 0 : index
    %c0_4 = arith.constant 0 : index
    %2 = vector.load %arg3[%c0_3, %c0_4] : memref<128x32xf32, #tpu.memory_space<vmem>>, vector<128x32xf32>
    %3 = arith.mulf %0, %1 : vector<128x32xf32>
    %cst = arith.constant dense<0.000000e+00> : vector<128xf32>
    %4 = vector.multi_reduction <add>, %3, %cst [1] : vector<128x32xf32> to vector<128xf32>
    %5 = vector.shape_cast %4 : vector<128xf32> to vector<128x1xf32>
    %6 = arith.mulf %0, %2 : vector<128x32xf32>
    %cst_5 = arith.constant dense<0.000000e+00> : vector<128xf32>
    %7 = vector.multi_reduction <add>, %6, %cst_5 [1] : vector<128x32xf32> to vector<128xf32>
    %8 = vector.shape_cast %7 : vector<128xf32> to vector<128x1xf32>
    %9 = vector.shape_cast %5 : vector<128x1xf32> to vector<1x128xf32>
    %c0_6 = arith.constant 0 : index
    %c0_7 = arith.constant 0 : index
    %10 = vector.load %arg4[%c0_6, %c0_7] : memref<1x128xf32, #tpu.memory_space<vmem>>, vector<1x128xf32>
    tpu.vector_store %arg4[%c0_6, %c0_7], %9 {strides = array<i32>} : memref<1x128xf32, #tpu.memory_space<vmem>>, vector<1x128xf32>,
    %11 = vector.shape_cast %8 : vector<128x1xf32> to vector<1x128xf32>
    %c0_8 = arith.constant 0 : index
    %c0_9 = arith.constant 0 : index
    %12 = vector.load %arg5[%c0_8, %c0_9] : memref<1x128xf32, #tpu.memory_space<vmem>>, vector<1x128xf32>
    tpu.vector_store %arg5[%c0_8, %c0_9], %11 {strides = array<i32>} : memref<1x128xf32, #tpu.memory_space<vmem>>, vector<1x128xf32>,
    return
  }
  func.func @transform_0(%arg0: i32) -> (i32, i32) {
    %c0_i32 = arith.constant 0 : i32
    %c0_i32_0 = arith.constant 0 : i32
    return %arg0, %c0_i32 : i32, i32
  }
  func.func @transform_1(%arg0: i32) -> (i32, i32) {
    %c0_i32 = arith.constant 0 : i32
    %c0_i32_0 = arith.constant 0 : i32
    return %arg0, %c0_i32 : i32, i32
  }
  func.func @transform_2(%arg0: i32) -> (i32, i32) {
    %c0_i32 = arith.constant 0 : i32
    %c0_i32_0 = arith.constant 0 : i32
    return %arg0, %c0_i32 : i32, i32
  }
  func.func @transform_3(%arg0: i32) -> (i32, i32) {
    %c0_i32 = arith.constant 0 : i32
    %c0_i32_0 = arith.constant 0 : i32
    return %c0_i32, %arg0 : i32, i32
  }
  func.func @transform_4(%arg0: i32) -> (i32, i32) {
    %c0_i32 = arith.constant 0 : i32
    %c0_i32_0 = arith.constant 0 : i32
    return %c0_i32, %arg0 : i32, i32
  }
}

</mosaic_0001>

<llo_original>
// kernel: tpu_custom_call.1
$region0: #{tpu_custom_call.1}
  #allocation0 [shape = 'u32[]', space=smem, size = 0x4, offset = 0x4, fixed_abs, tag = 'smem constant byte address 0x4 - core index']
  #allocation1 [shape = 'u32[144,128]{1,0:T(1,128)}', space=vmem, size = 0x12000, scoped, tag = 'internal scratch']
  %s0 = inlined_call_operand.vmem [shape: f32[256,32], index: 0, kind: input, shape index: {}]
  %s1 = inlined_call_operand.vmem [shape: f32[256,32], index: 1, kind: input, shape index: {}]
  %s2 = inlined_call_operand.vmem [shape: f32[256,32], index: 2, kind: input, shape index: {}]
  %s3 = inlined_call_operand.hbm [shape: f32[1,256], index: 3, kind: output, shape index: {0}]
  %s4 = inlined_call_operand.hbm [shape: f32[1,256], index: 4, kind: output, shape index: {1}]
  %5 = xla_tuple %s3, %s4
  %s6 = sld [smem:[#allocation0]]
  $region53: #{tpu_custom_call.1} parent=0
    _
  %s8 = ssub.s32 1, %s6
  %s9 = scalar_select 0, %s8, %s6
  $region1: #{tpu_custom_call.1} parent=0
    #allocation2 [shape = 'u8[1024]{0}', space=vmem, size = 0x400, scoped, tag = 'output window, operand 0']
    #allocation3 [shape = 's32[2]{0}', space=sflag, size = 0x8, scoped, tag = 'scoped memory for tpu_custom_call.1']
    #allocation4 [shape = 'u8[1024]{0}', space=vmem, size = 0x400, scoped, tag = 'output window, operand 1']
    #allocation5 [shape = 's32[2]{0}', space=sflag, size = 0x8, scoped, tag = 'scoped memory for tpu_custom_call.1']
    %10 = vsyncpa [#allocation3], 0
    %s11 = scalar_lea.sflag [#allocation3], 1
    %12 = vsyncpa %s11, 0
    %13 = vsyncpa [#allocation5], 0
    %s14 = scalar_lea.sflag [#allocation5], 1
    %15 = vsyncpa %s14, 0
    loop: start=0, step=1, limit=4
    $region2: #{tpu_custom_call.1} parent=1 // loop_pre_header
      _
    $region3: #{tpu_custom_call.1} parent=1 // loop_header
      %s17 = sphi 0, %s21
      %p18 = scmp.ge.s32.totalorder %s17, 4
      %s27 = sphi 0, %s29
      %s30 = sphi 0, %s27
      %s31 = sphi 0, %s30
      %s47 = sphi 0, %s31
      %s53 = sphi 0, %s55
      %s56 = sphi 0, %s53
      %s57 = sphi 0, %s56
      %s73 = sphi 0, %s57
      %s79 = sphi 0, %s81
      %s82 = sphi 0, %s79
      %s83 = sphi 0, %s82
      %s99 = sphi 0, %s83
      %s105 = sphi 0, %s107
      %s108 = sphi 0, %s105
      %s109 = sphi 0, %s108
      %s125 = sphi 0, %s109
      %s131 = sphi 0, %s133
      %s134 = sphi 0, %s131
      %s135 = sphi 0, %s134
      %s151 = sphi 0, %s135
    $region4: #{tpu_custom_call.1} parent=1 // loop_header_branch
      %20 = sbr.rel (%p18) target = $region8
    $region5: #{tpu_custom_call.1} parent=1 // loop_body
      %s22 = ssub.s32 %s17, 1
      %s23 = ssub.s32 %s17, 2
      %s24 = sadd.s32 %s17, 1
      %s25 = ssub.s32 %s17, %s24
      %p26 = scmp.eq.s32.totalorder %s25, 0
      %s28 = sadd.s32 %s27, 1
      %s29 = scalar_select %p26, %s27, %s28
      %p32 = pneg %p26
      %p33 = scmp.eq.s32.totalorder %s17, 1
      %p34 = por %p32, %p33
      %p35 = scmp.ne.s32.totalorder %s27, %s30
      %p36 = scmp.eq.s32.totalorder %s17, 0
      %p37 = por %p35, %p36
      %p38 = scmp.ne.s32.totalorder %s27, %s30
      %p39 = scmp.eq.s32.totalorder %s22, 1
      %p40 = por %p38, %p39
      %p41 = scmp.ne.s32.totalorder %s30, %s31
      %p42 = scmp.eq.s32.totalorder %s22, 0
      %p43 = por %p41, %p42
      %p44 = scmp.ne.s32.totalorder %s30, %s31
      %p45 = scmp.eq.s32.totalorder %s23, 1
      %p46 = por %p44, %p45
      %p48 = scmp.ne.s32.totalorder %s31, %s47
      %p49 = scmp.eq.s32.totalorder %s23, 0
      %p50 = por %p48, %p49
      %s51 = ssub.s32 %s17, %s24
      %p52 = scmp.eq.s32.totalorder %s51, 0
      %s54 = sadd.s32 %s53, 1
      %s55 = scalar_select %p52, %s53, %s54
      %p58 = pneg %p52
      %p59 = scmp.eq.s32.totalorder %s17, 1
      %p60 = por %p58, %p59
      %p61 = scmp.ne.s32.totalorder %s53, %s56
      %p62 = scmp.eq.s32.totalorder %s17, 0
      %p63 = por %p61, %p62
      %p64 = scmp.ne.s32.totalorder %s53, %s56
      %p65 = scmp.eq.s32.totalorder %s22, 1
      %p66 = por %p64, %p65
      %p67 = scmp.ne.s32.totalorder %s56, %s57
      %p68 = scmp.eq.s32.totalorder %s22, 0
      %p69 = por %p67, %p68
      %p70 = scmp.ne.s32.totalorder %s56, %s57
      %p71 = scmp.eq.s32.totalorder %s23, 1
      %p72 = por %p70, %p71
      %p74 = scmp.ne.s32.totalorder %s57, %s73
      %p75 = scmp.eq.s32.totalorder %s23, 0
      %p76 = por %p74, %p75
      %s77 = ssub.s32 %s17, %s24
      %p78 = scmp.eq.s32.totalorder %s77, 0
      %s80 = sadd.s32 %s79, 1
      %s81 = scalar_select %p78, %s79, %s80
      %p84 = pneg %p78
      %p85 = scmp.eq.s32.totalorder %s17, 1
      %p86 = por %p84, %p85
      %p87 = scmp.ne.s32.totalorder %s79, %s82
      %p88 = scmp.eq.s32.totalorder %s17, 0
      %p89 = por %p87, %p88
      %p90 = scmp.ne.s32.totalorder %s79, %s82
      %p91 = scmp.eq.s32.totalorder %s22, 1
      %p92 = por %p90, %p91
      %p93 = scmp.ne.s32.totalorder %s82, %s83
      %p94 = scmp.eq.s32.totalorder %s22, 0
      %p95 = por %p93, %p94
      %p96 = scmp.ne.s32.totalorder %s82, %s83
      %p97 = scmp.eq.s32.totalorder %s23, 1
      %p98 = por %p96, %p97
      %p100 = scmp.ne.s32.totalorder %s83, %s99
      %p101 = scmp.eq.s32.totalorder %s23, 0
      %p102 = por %p100, %p101
      %s103 = ssub.s32 %s17, %s24
      %p104 = scmp.eq.s32.totalorder %s103, 0
      %s106 = sadd.s32 %s105, 1
      %s107 = scalar_select %p104, %s105, %s106
      %p110 = pneg %p104
      %p111 = scmp.eq.s32.totalorder %s17, 1
      %p112 = por %p110, %p111
      %p113 = scmp.ne.s32.totalorder %s105, %s108
      %p114 = scmp.eq.s32.totalorder %s17, 0
      %p115 = por %p113, %p114
      %p116 = scmp.ne.s32.totalorder %s105, %s108
      %p117 = scmp.eq.s32.totalorder %s22, 1
      %p118 = por %p116, %p117
      %p119 = scmp.ne.s32.totalorder %s108, %s109
      %p120 = scmp.eq.s32.totalorder %s22, 0
      %p121 = por %p119, %p120
      %p122 = scmp.ne.s32.totalorder %s108, %s109
      %p123 = scmp.eq.s32.totalorder %s23, 1
      %p124 = por %p122, %p123
      %p126 = scmp.ne.s32.totalorder %s109, %s125
      %p127 = scmp.eq.s32.totalorder %s23, 0
      %p128 = por %p126, %p127
      %s129 = ssub.s32 %s17, %s24
      %p130 = scmp.eq.s32.totalorder %s129, 0
      %s132 = sadd.s32 %s131, 1
      %s133 = scalar_select %p130, %s131, %s132
      %p136 = pneg %p130
      %p137 = scmp.eq.s32.totalorder %s17, 1
      %p138 = por %p136, %p137
      %p139 = scmp.ne.s32.totalorder %s131, %s134
      %p140 = scmp.eq.s32.totalorder %s17, 0
      %p141 = por %p139, %p140
      %p142 = scmp.ne.s32.totalorder %s131, %s134
      %p143 = scmp.eq.s32.totalorder %s22, 1
      %p144 = por %p142, %p143
      %p145 = scmp.ne.s32.totalorder %s134, %s135
      %p146 = scmp.eq.s32.totalorder %s22, 0
      %p147 = por %p145, %p146
      %p148 = scmp.ne.s32.totalorder %s134, %s135
      %p149 = scmp.eq.s32.totalorder %s23, 1
      %p150 = por %p148, %p149
      %p152 = scmp.ne.s32.totalorder %s135, %s151
      %p153 = scmp.eq.s32.totalorder %s23, 0
      %p154 = por %p152, %p153
      %p155 = scmp.le.s32.totalorder 1, %s17
      %p156 = scmp.lt.s32.totalorder %s17, 3
      %p157 = pnand %p155, %p156
      %p158 = pneg %p157
      // Predicated region
      $region9: #{tpu_custom_call.1} parent=5 // pred_check
        _
      $region10: #{tpu_custom_call.1} parent=5 // pred_check_branch
        %160 = sbr.rel (%p157) target = $region12
      $region11: #{tpu_custom_call.1} parent=5 // pred_region
        %s161 = ssub.s32 %s17, 1
      $region12: #{tpu_custom_call.1} parent=5 // pred_fallthru
        _
      %p162 = scmp.lt.s32.totalorder %s17, 2
      // Predicated region
      $region13: #{tpu_custom_call.1} parent=5 // pred_check
        %p163 = pneg %p162
      $region14: #{tpu_custom_call.1} parent=5 // pred_check_branch
        %165 = sbr.rel (%p163) target = $region16
      $region15: #{tpu_custom_call.1} parent=5 // pred_region
        // Predicated region
        $region17: #{tpu_custom_call.1} parent=15 // pred_check
          %p166 = pneg %p37
        $region18: #{tpu_custom_call.1} parent=15 // pred_check_branch
          %168 = sbr.rel (%p166) target = $region20
        $region19: #{tpu_custom_call.1} parent=15 // pred_region
          %s169 = smul.u32 16, %s17
          %p170 = scmp.lt.s32.totalorder %s169, 31
          %s171 = scalar_select %p170, %s169, 31
          %s172 = smul.addr %s171, 8
          %s173 = scalar_lea.vmem %s0, %s172
          %s174 = smul.u32 16, %s17
        $region20: #{tpu_custom_call.1} parent=15 // pred_fallthru
          _
        // Predicated region
        $region21: #{tpu_custom_call.1} parent=15 // pred_check
          %p175 = pneg %p63
        $region22: #{tpu_custom_call.1} parent=15 // pred_check_branch
          %177 = sbr.rel (%p175) target = $region24
        $region23: #{tpu_custom_call.1} parent=15 // pred_region
          %s178 = smul.u32 16, %s17
          %p179 = scmp.lt.s32.totalorder %s178, 31
          %s180 = scalar_select %p179, %s178, 31
          %s181 = smul.addr %s180, 8
          %s182 = scalar_lea.vmem %s1, %s181
          %s183 = smul.u32 16, %s17
        $region24: #{tpu_custom_call.1} parent=15 // pred_fallthru
          _
        // Predicated region
        $region25: #{tpu_custom_call.1} parent=15 // pred_check
          %p184 = pneg %p89
        $region26: #{tpu_custom_call.1} parent=15 // pred_check_branch
          %186 = sbr.rel (%p184) target = $region28
        $region27: #{tpu_custom_call.1} parent=15 // pred_region
          %s187 = smul.u32 16, %s17
          %p188 = scmp.lt.s32.totalorder %s187, 31
          %s189 = scalar_select %p188, %s187, 31
          %s190 = smul.addr %s189, 8
          %s191 = scalar_lea.vmem %s2, %s190
          %s192 = smul.u32 16, %s17
        $region28: #{tpu_custom_call.1} parent=15 // pred_fallthru
          _
      $region16: #{tpu_custom_call.1} parent=5 // pred_fallthru
        _
      %p193 = scmp.le.s32.totalorder 1, %s17
      %p194 = scmp.lt.s32.totalorder %s17, 3
      %p195 = pnand %p193, %p194
      %p196 = pneg %p195
      // Predicated region
      $region29: #{tpu_custom_call.1} parent=5 // pred_check
        _
      $region30: #{tpu_custom_call.1} parent=5 // pred_check_branch
        %198 = sbr.rel (%p195) target = $region32
      $region31: #{tpu_custom_call.1} parent=5 // pred_region
        %s199 = ssub.s32 %s17, 1
        %s200 = smul.u32 16, %s22
        %p201 = scmp.lt.s32.totalorder %s200, 31
        %s202 = scalar_select %p201, %s200, 31
        %s203 = smul.addr %s202, 8
        %s204 = scalar_lea.vmem %s0, %s203
        %p205 = pneg %p43
        %p206 = pneg %p40
        %s207 = smul.u32 16, %s22
        %p208 = scmp.lt.s32.totalorder %s207, 31
        %s209 = scalar_select %p208, %s207, 31
        %s210 = smul.addr %s209, 8
        %s211 = scalar_lea.vmem %s1, %s210
        %p212 = pneg %p69
        %p213 = pneg %p66
        %s214 = smul.u32 16, %s22
        %p215 = scmp.lt.s32.totalorder %s214, 31
        %s216 = scalar_select %p215, %s214, 31
        %s217 = smul.addr %s216, 8
        %s218 = scalar_lea.vmem %s2, %s217
        %p219 = pneg %p95
        %p220 = pneg %p92
        %p221 = pneg %p121
        %p222 = pneg %p118
        %s223 = sand.u32 %s108, 1
        %s224 = scalar_lea.sflag [#allocation3], %s223
        %s225 = sand.u32 %s108, 1
        %s226 = scalar_lea.vmem [#allocation2], %s225
        %p227 = pneg %p147
        %p228 = pneg %p144
        %s229 = sand.u32 %s134, 1
        %s230 = scalar_lea.sflag [#allocation5], %s229
        %s231 = sand.u32 %s134, 1
        %s232 = scalar_lea.vmem [#allocation4], %s231
        %s233 = smul.u32 16, %s22
        %p234 = scmp.lt.s32.totalorder %s233, 31
        %s235 = scalar_select %p234, %s233, 31
        %s236 = smul.addr %s235, 8
        %s237 = scalar_lea.vmem %s0, %s236
        %s238 = smul.u32 16, %s22
        %s239 = smul.u32 16, %s22
        %p240 = scmp.lt.s32.totalorder %s239, 31
        %s241 = scalar_select %p240, %s239, 31
        %s242 = smul.addr %s241, 8
        %s243 = scalar_lea.vmem %s1, %s242
        %s244 = smul.u32 16, %s22
        %s245 = smul.u32 16, %s22
        %p246 = scmp.lt.s32.totalorder %s245, 31
        %s247 = scalar_select %p246, %s245, 31
        %s248 = smul.addr %s247, 8
        %s249 = scalar_lea.vmem %s2, %s248
        %s250 = smul.u32 16, %s22
        %v251 = vld [vmem:[%s237] sm:$0xff]
        %v252 = vld [vmem:[%s237 + $0x8] sm:$0xff]
        %v253 = vld [vmem:[%s237 + $0x10] sm:$0xff]
        %v254 = vld [vmem:[%s237 + $0x18] sm:$0xff]
        %v255 = vld [vmem:[%s237 + $0x20] sm:$0xff]
        %v256 = vld [vmem:[%s237 + $0x28] sm:$0xff]
        %v257 = vld [vmem:[%s237 + $0x30] sm:$0xff]
        %v258 = vld [vmem:[%s237 + $0x38] sm:$0xff]
        %v259 = vld [vmem:[%s237 + $0x40] sm:$0xff]
        %v260 = vld [vmem:[%s237 + $0x48] sm:$0xff]
        %v261 = vld [vmem:[%s237 + $0x50] sm:$0xff]
        %v262 = vld [vmem:[%s237 + $0x58] sm:$0xff]
        %v263 = vld [vmem:[%s237 + $0x60] sm:$0xff]
        %v264 = vld [vmem:[%s237 + $0x68] sm:$0xff]
        %v265 = vld [vmem:[%s237 + $0x70] sm:$0xff]
        %v266 = vld [vmem:[%s237 + $0x78] sm:$0xff]
        %v267 = vld [vmem:[%s243] sm:$0xff]
        %v268 = vld [vmem:[%s243 + $0x8] sm:$0xff]
        %v269 = vld [vmem:[%s243 + $0x10] sm:$0xff]
        %v270 = vld [vmem:[%s243 + $0x18] sm:$0xff]
        %v271 = vld [vmem:[%s243 + $0x20] sm:$0xff]
        %v272 = vld [vmem:[%s243 + $0x28] sm:$0xff]
        %v273 = vld [vmem:[%s243 + $0x30] sm:$0xff]
        %v274 = vld [vmem:[%s243 + $0x38] sm:$0xff]
        %v275 = vld [vmem:[%s243 + $0x40] sm:$0xff]
        %v276 = vld [vmem:[%s243 + $0x48] sm:$0xff]
        %v277 = vld [vmem:[%s243 + $0x50] sm:$0xff]
        %v278 = vld [vmem:[%s243 + $0x58] sm:$0xff]
        %v279 = vld [vmem:[%s243 + $0x60] sm:$0xff]
        %v280 = vld [vmem:[%s243 + $0x68] sm:$0xff]
        %v281 = vld [vmem:[%s243 + $0x70] sm:$0xff]
        %v282 = vld [vmem:[%s243 + $0x78] sm:$0xff]
        %v283 = vld [vmem:[%s249] sm:$0xff]
        %v284 = vld [vmem:[%s249 + $0x8] sm:$0xff]
        %v285 = vld [vmem:[%s249 + $0x10] sm:$0xff]
        %v286 = vld [vmem:[%s249 + $0x18] sm:$0xff]
        %v287 = vld [vmem:[%s249 + $0x20] sm:$0xff]
        %v288 = vld [vmem:[%s249 + $0x28] sm:$0xff]
        %v289 = vld [vmem:[%s249 + $0x30] sm:$0xff]
        %v290 = vld [vmem:[%s249 + $0x38] sm:$0xff]
        %v291 = vld [vmem:[%s249 + $0x40] sm:$0xff]
        %v292 = vld [vmem:[%s249 + $0x48] sm:$0xff]
        %v293 = vld [vmem:[%s249 + $0x50] sm:$0xff]
        %v294 = vld [vmem:[%s249 + $0x58] sm:$0xff]
        %v295 = vld [vmem:[%s249 + $0x60] sm:$0xff]
        %v296 = vld [vmem:[%s249 + $0x68] sm:$0xff]
        %v297 = vld [vmem:[%s249 + $0x70] sm:$0xff]
        %v298 = vld [vmem:[%s249 + $0x78] sm:$0xff]
        %v299 = vmul.f32 %v251, %v267
        %v300 = vmul.f32 %v252, %v268
        %v301 = vmul.f32 %v253, %v269
        %v302 = vmul.f32 %v254, %v270
        %v303 = vmul.f32 %v255, %v271
        %v304 = vmul.f32 %v256, %v272
        %v305 = vmul.f32 %v257, %v273
        %v306 = vmul.f32 %v258, %v274
        %v307 = vmul.f32 %v259, %v275
        %v308 = vmul.f32 %v260, %v276
        %v309 = vmul.f32 %v261, %v277
        %v310 = vmul.f32 %v262, %v278
        %v311 = vmul.f32 %v263, %v279
        %v312 = vmul.f32 %v264, %v280
        %v313 = vmul.f32 %v265, %v281
        %v314 = vmul.f32 %v266, %v282
        %vm315 = vcmask 261120
        %v316 = vsel %vm315, %v299, 0.0
        %317 = vadd.xlane.f32.xlu0 %v316
        %v318 = vpop.xlane.xlu0 %317
        %v319 = vsel %vm315, %v300, 0.0
        %320 = vadd.xlane.f32.xlu0 %v319
        %v321 = vpop.xlane.xlu0 %320
        %v322 = vsel %vm315, %v301, 0.0
        %323 = vadd.xlane.f32.xlu0 %v322
        %v324 = vpop.xlane.xlu0 %323
        %v325 = vsel %vm315, %v302, 0.0
        %326 = vadd.xlane.f32.xlu0 %v325
        %v327 = vpop.xlane.xlu0 %326
        %v328 = vsel %vm315, %v303, 0.0
        %329 = vadd.xlane.f32.xlu0 %v328
        %v330 = vpop.xlane.xlu0 %329
        %v331 = vsel %vm315, %v304, 0.0
        %332 = vadd.xlane.f32.xlu0 %v331
        %v333 = vpop.xlane.xlu0 %332
        %v334 = vsel %vm315, %v305, 0.0
        %335 = vadd.xlane.f32.xlu0 %v334
        %v336 = vpop.xlane.xlu0 %335
        %v337 = vsel %vm315, %v306, 0.0
        %338 = vadd.xlane.f32.xlu0 %v337
        %v339 = vpop.xlane.xlu0 %338
        %v340 = vsel %vm315, %v307, 0.0
        %341 = vadd.xlane.f32.xlu0 %v340
        %v342 = vpop.xlane.xlu0 %341
        %v343 = vsel %vm315, %v308, 0.0
        %344 = vadd.xlane.f32.xlu0 %v343
        %v345 = vpop.xlane.xlu0 %344
        %v346 = vsel %vm315, %v309, 0.0
        %347 = vadd.xlane.f32.xlu0 %v346
        %v348 = vpop.xlane.xlu0 %347
        %v349 = vsel %vm315, %v310, 0.0
        %350 = vadd.xlane.f32.xlu0 %v349
        %v351 = vpop.xlane.xlu0 %350
        %v352 = vsel %vm315, %v311, 0.0
        %353 = vadd.xlane.f32.xlu0 %v352
        %v354 = vpop.xlane.xlu0 %353
        %v355 = vsel %vm315, %v312, 0.0
        %356 = vadd.xlane.f32.xlu0 %v355
        %v357 = vpop.xlane.xlu0 %356
        %v358 = vsel %vm315, %v313, 0.0
        %359 = vadd.xlane.f32.xlu0 %v358
        %v360 = vpop.xlane.xlu0 %359
        %v361 = vsel %vm315, %v314, 0.0
        %362 = vadd.xlane.f32.xlu0 %v361
        %v363 = vpop.xlane.xlu0 %362
        %v364 = vmul.f32 %v251, %v283
        %v365 = vmul.f32 %v252, %v284
        %v366 = vmul.f32 %v253, %v285
        %v367 = vmul.f32 %v254, %v286
        %v368 = vmul.f32 %v255, %v287
        %v369 = vmul.f32 %v256, %v288
        %v370 = vmul.f32 %v257, %v289
        %v371 = vmul.f32 %v258, %v290
        %v372 = vmul.f32 %v259, %v291
        %v373 = vmul.f32 %v260, %v292
        %v374 = vmul.f32 %v261, %v293
        %v375 = vmul.f32 %v262, %v294
        %v376 = vmul.f32 %v263, %v295
        %v377 = vmul.f32 %v264, %v296
        %v378 = vmul.f32 %v265, %v297
        %v379 = vmul.f32 %v266, %v298
        %v380 = vsel %vm315, %v364, 0.0
        %381 = vadd.xlane.f32.xlu0 %v380
        %v382 = vpop.xlane.xlu0 %381
        %v383 = vsel %vm315, %v365, 0.0
        %384 = vadd.xlane.f32.xlu0 %v383
        %v385 = vpop.xlane.xlu0 %384
        %v386 = vsel %vm315, %v366, 0.0
        %387 = vadd.xlane.f32.xlu0 %v386
        %v388 = vpop.xlane.xlu0 %387
        %v389 = vsel %vm315, %v367, 0.0
        %390 = vadd.xlane.f32.xlu0 %v389
        %v391 = vpop.xlane.xlu0 %390
        %v392 = vsel %vm315, %v368, 0.0
        %393 = vadd.xlane.f32.xlu0 %v392
        %v394 = vpop.xlane.xlu0 %393
        %v395 = vsel %vm315, %v369, 0.0
        %396 = vadd.xlane.f32.xlu0 %v395
        %v397 = vpop.xlane.xlu0 %396
        %v398 = vsel %vm315, %v370, 0.0
        %399 = vadd.xlane.f32.xlu0 %v398
        %v400 = vpop.xlane.xlu0 %399
        %v401 = vsel %vm315, %v371, 0.0
        %402 = vadd.xlane.f32.xlu0 %v401
        %v403 = vpop.xlane.xlu0 %402
        %v404 = vsel %vm315, %v372, 0.0
        %405 = vadd.xlane.f32.xlu0 %v404
        %v406 = vpop.xlane.xlu0 %405
        %v407 = vsel %vm315, %v373, 0.0
        %408 = vadd.xlane.f32.xlu0 %v407
        %v409 = vpop.xlane.xlu0 %408
        %v410 = vsel %vm315, %v374, 0.0
        %411 = vadd.xlane.f32.xlu0 %v410
        %v412 = vpop.xlane.xlu0 %411
        %v413 = vsel %vm315, %v375, 0.0
        %414 = vadd.xlane.f32.xlu0 %v413
        %v415 = vpop.xlane.xlu0 %414
        %v416 = vsel %vm315, %v376, 0.0
        %417 = vadd.xlane.f32.xlu0 %v416
        %v418 = vpop.xlane.xlu0 %417
        %v419 = vsel %vm315, %v377, 0.0
        %420 = vadd.xlane.f32.xlu0 %v419
        %v421 = vpop.xlane.xlu0 %420
        %v422 = vsel %vm315, %v378, 0.0
        %423 = vadd.xlane.f32.xlu0 %v422
        %v424 = vpop.xlane.xlu0 %423
        %v425 = vsel %vm315, %v379, 0.0
        %426 = vadd.xlane.f32.xlu0 %v425
        %v427 = vpop.xlane.xlu0 %426
        %v444 = vlaneseq
        %v445 = vand.u32 %v444, 127
        %v446 = vlaneseq
        %v447 = vshrl.u32 %v446, 7
        %v448 = vsub.s32 %v445, %v447
        %v449 = vrot.slane %v318, %v448
        %v450 = vadd.s32 %v445, 4294967288
        %v451 = vlaneseq
        %v452 = vshrl.u32 %v451, 7
        %v453 = vsub.s32 %v450, %v452
        %v454 = vrot.slane %v321, %v453
        %vm455 = vcmask 130112
        %v456 = vsel %vm455, %v454, %v449
        %v457 = vadd.s32 %v445, 4294967280
        %v458 = vlaneseq
        %v459 = vshrl.u32 %v458, 7
        %v460 = vsub.s32 %v457, %v459
        %v461 = vrot.slane %v324, %v460
        %vm462 = vcmask 195712
        %v463 = vsel %vm462, %v461, %v456
        %v464 = vadd.s32 %v445, 4294967272
        %v465 = vlaneseq
        %v466 = vshrl.u32 %v465, 7
        %v467 = vsub.s32 %v464, %v466
        %v468 = vrot.slane %v327, %v467
        %vm469 = vcmask 261312
        %v470 = vsel %vm469, %v468, %v463
        %v471 = vadd.s32 %v445, 4294967264
        %v472 = vlaneseq
        %v473 = vshrl.u32 %v472, 7
        %v474 = vsub.s32 %v471, %v473
        %v475 = vrot.slane %v330, %v474
        %vm476 = vcmask 326912
        %v477 = vsel %vm476, %v475, %v470
        %v478 = vadd.s32 %v445, 4294967256
        %v479 = vlaneseq
        %v480 = vshrl.u32 %v479, 7
        %v481 = vsub.s32 %v478, %v480
        %v482 = vrot.slane %v333, %v481
        %vm483 = vcmask 392512
        %v484 = vsel %vm483, %v482, %v477
        %v485 = vadd.s32 %v445, 4294967248
        %v486 = vlaneseq
        %v487 = vshrl.u32 %v486, 7
        %v488 = vsub.s32 %v485, %v487
        %v489 = vrot.slane %v336, %v488
        %vm490 = vcmask 458112
        %v491 = vsel %vm490, %v489, %v484
        %v492 = vadd.s32 %v445, 4294967240
        %v493 = vlaneseq
        %v494 = vshrl.u32 %v493, 7
        %v495 = vsub.s32 %v492, %v494
        %v496 = vrot.slane %v339, %v495
        %vm497 = vcmask 523712
        %v498 = vsel %vm497, %v496, %v491
        %v499 = vadd.s32 %v445, 4294967232
        %v500 = vlaneseq
        %v501 = vshrl.u32 %v500, 7
        %v502 = vsub.s32 %v499, %v501
        %v503 = vrot.slane %v342, %v502
        %vm504 = vcmask 589312
        %v505 = vsel %vm504, %v503, %v498
        %v506 = vadd.s32 %v445, 4294967224
        %v507 = vlaneseq
        %v508 = vshrl.u32 %v507, 7
        %v509 = vsub.s32 %v506, %v508
        %v510 = vrot.slane %v345, %v509
        %vm511 = vcmask 654912
        %v512 = vsel %vm511, %v510, %v505
        %v513 = vadd.s32 %v445, 4294967216
        %v514 = vlaneseq
        %v515 = vshrl.u32 %v514, 7
        %v516 = vsub.s32 %v513, %v515
        %v517 = vrot.slane %v348, %v516
        %vm518 = vcmask 720512
        %v519 = vsel %vm518, %v517, %v512
        %v520 = vadd.s32 %v445, 4294967208
        %v521 = vlaneseq
        %v522 = vshrl.u32 %v521, 7
        %v523 = vsub.s32 %v520, %v522
        %v524 = vrot.slane %v351, %v523
        %vm525 = vcmask 786112
        %v526 = vsel %vm525, %v524, %v519
        %v527 = vadd.s32 %v445, 4294967200
        %v528 = vlaneseq
        %v529 = vshrl.u32 %v528, 7
        %v530 = vsub.s32 %v527, %v529
        %v531 = vrot.slane %v354, %v530
        %vm532 = vcmask 851712
        %v533 = vsel %vm532, %v531, %v526
        %v534 = vadd.s32 %v445, 4294967192
        %v535 = vlaneseq
        %v536 = vshrl.u32 %v535, 7
        %v537 = vsub.s32 %v534, %v536
        %v538 = vrot.slane %v357, %v537
        %vm539 = vcmask 917312
        %v540 = vsel %vm539, %v538, %v533
        %v541 = vadd.s32 %v445, 4294967184
        %v542 = vlaneseq
        %v543 = vshrl.u32 %v542, 7
        %v544 = vsub.s32 %v541, %v543
        %v545 = vrot.slane %v360, %v544
        %vm546 = vcmask 982912
        %v547 = vsel %vm546, %v545, %v540
        %v548 = vadd.s32 %v445, 4294967176
        %v549 = vlaneseq
        %v550 = vshrl.u32 %v549, 7
        %v551 = vsub.s32 %v548, %v550
        %v552 = vrot.slane %v363, %v551
        %vm553 = vcmask 1048512
        %v554 = vsel %vm553, %v552, %v547
        %556 = vst [vmem:[%s226] sm:$0x1] %v554
        %v573 = vlaneseq
        %v574 = vshrl.u32 %v573, 7
        %v575 = vsub.s32 %v445, %v574
        %v576 = vrot.slane %v382, %v575
        %v577 = vlaneseq
        %v578 = vshrl.u32 %v577, 7
        %v579 = vsub.s32 %v450, %v578
        %v580 = vrot.slane %v385, %v579
        %v581 = vsel %vm455, %v580, %v576
        %v582 = vlaneseq
        %v583 = vshrl.u32 %v582, 7
        %v584 = vsub.s32 %v457, %v583
        %v585 = vrot.slane %v388, %v584
        %v586 = vsel %vm462, %v585, %v581
        %v587 = vlaneseq
        %v588 = vshrl.u32 %v587, 7
        %v589 = vsub.s32 %v464, %v588
        %v590 = vrot.slane %v391, %v589
        %v591 = vsel %vm469, %v590, %v586
        %v592 = vlaneseq
        %v593 = vshrl.u32 %v592, 7
        %v594 = vsub.s32 %v471, %v593
        %v595 = vrot.slane %v394, %v594
        %v596 = vsel %vm476, %v595, %v591
        %v597 = vlaneseq
        %v598 = vshrl.u32 %v597, 7
        %v599 = vsub.s32 %v478, %v598
        %v600 = vrot.slane %v397, %v599
        %v601 = vsel %vm483, %v600, %v596
        %v602 = vlaneseq
        %v603 = vshrl.u32 %v602, 7
        %v604 = vsub.s32 %v485, %v603
        %v605 = vrot.slane %v400, %v604
        %v606 = vsel %vm490, %v605, %v601
        %v607 = vlaneseq
        %v608 = vshrl.u32 %v607, 7
        %v609 = vsub.s32 %v492, %v608
        %v610 = vrot.slane %v403, %v609
        %v611 = vsel %vm497, %v610, %v606
        %v612 = vlaneseq
        %v613 = vshrl.u32 %v612, 7
        %v614 = vsub.s32 %v499, %v613
        %v615 = vrot.slane %v406, %v614
        %v616 = vsel %vm504, %v615, %v611
        %v617 = vlaneseq
        %v618 = vshrl.u32 %v617, 7
        %v619 = vsub.s32 %v506, %v618
        %v620 = vrot.slane %v409, %v619
        %v621 = vsel %vm511, %v620, %v616
        %v622 = vlaneseq
        %v623 = vshrl.u32 %v622, 7
        %v624 = vsub.s32 %v513, %v623
        %v625 = vrot.slane %v412, %v624
        %v626 = vsel %vm518, %v625, %v621
        %v627 = vlaneseq
        %v628 = vshrl.u32 %v627, 7
        %v629 = vsub.s32 %v520, %v628
        %v630 = vrot.slane %v415, %v629
        %v631 = vsel %vm525, %v630, %v626
        %v632 = vlaneseq
        %v633 = vshrl.u32 %v632, 7
        %v634 = vsub.s32 %v527, %v633
        %v635 = vrot.slane %v418, %v634
        %v636 = vsel %vm532, %v635, %v631
        %v637 = vlaneseq
        %v638 = vshrl.u32 %v637, 7
        %v639 = vsub.s32 %v534, %v638
        %v640 = vrot.slane %v421, %v639
        %v641 = vsel %vm539, %v640, %v636
        %v642 = vlaneseq
        %v643 = vshrl.u32 %v642, 7
        %v644 = vsub.s32 %v541, %v643
        %v645 = vrot.slane %v424, %v644
        %v646 = vsel %vm546, %v645, %v641
        %v647 = vlaneseq
        %v648 = vshrl.u32 %v647, 7
        %v649 = vsub.s32 %v548, %v648
        %v650 = vrot.slane %v427, %v649
        %v651 = vsel %vm553, %v650, %v646
        %653 = vst [vmem:[%s232] sm:$0x1] %v651
        %s654 = sand.u32 %s108, 1
        %s655 = scalar_lea.sflag [#allocation3], %s654
        %s656 = sand.u32 %s108, 1
        %s657 = scalar_lea.vmem [#allocation2], %s656
        %s658 = sand.u32 %s134, 1
        %s659 = scalar_lea.sflag [#allocation5], %s658
        %s660 = sand.u32 %s134, 1
        %s661 = scalar_lea.vmem [#allocation4], %s660
        // Predicated region
        $region33: #{tpu_custom_call.1} parent=31 // pred_check
          %p662 = pneg %p118
        $region34: #{tpu_custom_call.1} parent=31 // pred_check_branch
          %664 = sbr.rel (%p662) target = $region36
        $region35: #{tpu_custom_call.1} parent=31 // pred_region
          %s666 = ssub.s32 16, 16
          %667 = vsyncadd %s655, %s666
          %s668 = smul.addr %s22, 16
          %s669 = scalar_lea.hbm %s3, %s668
          %s671 = sshll.u32 %s657, 4
          %s672 = int_to_ptr.vmem [resolvable:$true] %s671
          %674 = dma.vmem_to_hbm [thread:$0]  %s672, 16, %s669, %s655
        $region36: #{tpu_custom_call.1} parent=31 // pred_fallthru
          _
        // Predicated region
        $region37: #{tpu_custom_call.1} parent=31 // pred_check
          %p675 = pneg %p144
        $region38: #{tpu_custom_call.1} parent=31 // pred_check_branch
          %677 = sbr.rel (%p675) target = $region40
        $region39: #{tpu_custom_call.1} parent=31 // pred_region
          %s679 = ssub.s32 16, 16
          %680 = vsyncadd %s659, %s679
          %s681 = smul.addr %s22, 16
          %s682 = scalar_lea.hbm %s4, %s681
          %s684 = sshll.u32 %s661, 4
          %s685 = int_to_ptr.vmem [resolvable:$true] %s684
          %687 = dma.vmem_to_hbm [thread:$0]  %s685, 16, %s682, %s659
        $region40: #{tpu_custom_call.1} parent=31 // pred_fallthru
          _
      $region32: #{tpu_custom_call.1} parent=5 // pred_fallthru
        _
      %p688 = scmp.le.s32.totalorder 2, %s17
      // Predicated region
      $region41: #{tpu_custom_call.1} parent=5 // pred_check
        %p689 = pneg %p688
      $region42: #{tpu_custom_call.1} parent=5 // pred_check_branch
        %691 = sbr.rel (%p689) target = $region44
      $region43: #{tpu_custom_call.1} parent=5 // pred_region
        %s692 = ssub.s32 %s17, 2
        // Predicated region
        $region45: #{tpu_custom_call.1} parent=43 // pred_check
          %p693 = pneg %p124
        $region46: #{tpu_custom_call.1} parent=43 // pred_check_branch
          %695 = sbr.rel (%p693) target = $region48
        $region47: #{tpu_custom_call.1} parent=43 // pred_region
          %s696 = sand.u32 %s109, 1
          %s697 = scalar_lea.sflag [#allocation3], %s696
          %s698 = sand.u32 %s109, 1
          %s699 = scalar_lea.vmem [#allocation2], %s698
          %700 = dma.done %s697, 16
        $region48: #{tpu_custom_call.1} parent=43 // pred_fallthru
          _
        // Predicated region
        $region49: #{tpu_custom_call.1} parent=43 // pred_check
          %p701 = pneg %p150
        $region50: #{tpu_custom_call.1} parent=43 // pred_check_branch
          %703 = sbr.rel (%p701) target = $region52
        $region51: #{tpu_custom_call.1} parent=43 // pred_region
          %s704 = sand.u32 %s135, 1
          %s705 = scalar_lea.sflag [#allocation5], %s704
          %s706 = sand.u32 %s135, 1
          %s707 = scalar_lea.vmem [#allocation4], %s706
          %708 = dma.done %s705, 16
        $region52: #{tpu_custom_call.1} parent=43 // pred_fallthru
          _
      $region44: #{tpu_custom_call.1} parent=5 // pred_fallthru
        _
    $region6: #{tpu_custom_call.1} parent=1 // loop_footer
      %s21 = sadd.s32 1, %s17
    $region7: #{tpu_custom_call.1} parent=1 // loop_footer_branch
      %16 = sbr.rel target = $region3
    $region8: #{tpu_custom_call.1} parent=1 // loop_exit
      _
    %709 = vsyncpa [#allocation3], 1
    %s710 = scalar_lea.sflag [#allocation3], 1
    %711 = vsyncpa %s710, 1
    %712 = vsyncpa [#allocation5], 1
    %s713 = scalar_lea.sflag [#allocation5], 1
    %714 = vsyncpa %s713, 1

</llo_original>
